<compile_context>
chip_gen: v5e
topology: v5e:2x2
jax: 0.10.0
libtpu: 0.0.40
codegen_flags: <defaults>
</compile_context>

<pallas_src>
import functools

import jax
import jax.numpy as jnp
import numpy as np
from jax.experimental import pallas as pl
from jax.experimental.pallas import tpu as pltpu

_NUM_SHARDS = 2  # leading "parallel" grid axis (v7x has 2 TensorCores/chip)


def _ldam_kernel(x_ref, tgt_ref, bm_ref, w_ref, num_ref, den_ref, *, s, class_axis):
    """One batch tile of LDAM cross-entropy; accumulates partial sums.

    class_axis == 0: x_ref is [C, T]  (classes on sublanes, samples on lanes)
    class_axis == 1: x_ref is [T, C]  (samples on sublanes, classes on lanes)
    tgt/bm/w refs are [1, T] (class_axis 0) or [T, 1] (class_axis 1).
    """
    step = pl.program_id(1)

    @pl.when(step == 0)
    def _init():
        num_ref[...] = jnp.zeros_like(num_ref)
        den_ref[...] = jnp.zeros_like(den_ref)

    x = x_ref[...].astype(jnp.float32)
    tgt = tgt_ref[...]          # int32 class index per sample
    bm = bm_ref[...]            # m_list[target]  (0 for padded samples)
    w = w_ref[...]              # weight[target]  (0 for padded samples)

    cls = jax.lax.broadcasted_iota(jnp.int32, x.shape, class_axis)
    mask = cls == tgt           # one-hot of target (the scatter_ in torch)

    # output = where(index, x - batch_m, x);  z = s * output   (fused, one pass)
    z = x * s - jnp.where(mask, bm * s, 0.0)

    zmax = jnp.max(z, axis=class_axis, keepdims=True)
    sumexp = jnp.sum(jnp.exp(z - zmax), axis=class_axis, keepdims=True)
    lse = zmax + jnp.log(sumexp)
    z_t = jnp.sum(jnp.where(mask, z, 0.0), axis=class_axis, keepdims=True)
    per_sample = lse - z_t      # -log softmax(z)[target]   (per-sample NLL)

    # Padded samples carry w == 0, so they drop out of both sums.
    num_ref[...] += jnp.sum(w * per_sample, keepdims=True)   # broadcasts (1,1)
    den_ref[...] += jnp.sum(w, keepdims=True)


def _round_up(a, m):
    return ((a + m - 1) // m) * m


def _vmem_capacity_bytes():
    try:
        return int(pltpu.get_tpu_info().vmem_capacity_bytes)
    except Exception:
        return 64 << 20  # conservative fallback (v7x per-core VMEM)


def ldam_loss_pallas(x, target, m_list, s=30.0, weight=None):
    """x: [B, C] f32/bf16 logits, target: [B] int, m_list: [C], weight: optional [C]."""
    B, C = x.shape
    if x.dtype != jnp.bfloat16:
        x = x.astype(jnp.float32)
    target = target.astype(jnp.int32)
    m = jnp.asarray(m_list, jnp.float32).reshape(C)
    w = (jnp.ones((C,), jnp.float32) if weight is None
         else jnp.asarray(weight, jnp.float32).reshape(C))

    # Tiny wrapper-side gathers: per-sample margin & per-sample weight.
    bm = m[target]              # [B]
    wt = w[target]              # [B]

    # ---- generation-aware tile sizing --------------------------------------
    vmem_cap = _vmem_capacity_bytes()                # 128 MiB v5e/v6e, 64 MiB v7x
    vmem_limit = max(32 << 20, (vmem_cap * 3) // 4)
    budget = vmem_limit // 3                         # dbl-buffered inputs + temps
    per_sample_bytes = 4 * (7 * C + 6)               # x (2 bufs) + aux + live temps

    classes_on_sublanes = C <= 32
    if classes_on_sublanes:
        tile = (budget // per_sample_bytes) // 128 * 128
        tile = max(128, min(8192, tile))
        tile = min(tile, _round_up(max(1, pl.cdiv(B, _NUM_SHARDS)), 128))
    else:
        tile = (budget // per_sample_bytes) // 8 * 8
        tile = max(8, min(2048, tile))
        tile = min(tile, _round_up(max(1, pl.cdiv(B, _NUM_SHARDS)), 8))

    n_tiles = _round_up(pl.cdiv(B, tile), _NUM_SHARDS)
    steps_per_shard = n_tiles // _NUM_SHARDS
    Bp = n_tiles * tile
    pad = Bp - B

    if classes_on_sublanes:
        # [C, Bp]: classes on sublanes, samples lane-dense.
        xp = jnp.pad(x.T, ((0, 0), (0, pad)))
        tgtp = jnp.pad(target, (0, pad)).reshape(1, Bp)
        bmp = jnp.pad(bm, (0, pad)).reshape(1, Bp)
        wtp = jnp.pad(wt, (0, pad)).reshape(1, Bp)    # padded samples: weight 0
        x_spec = pl.BlockSpec((C, tile), lambda c, i: (0, c * steps_per_shard + i))
        aux_spec = pl.BlockSpec((1, tile), lambda c, i: (0, c * steps_per_shard + i))
        class_axis = 0
    else:
        # [Bp, C]: batch-major; full class row per sample (no class tiling).
        xp = jnp.pad(x, ((0, pad), (0, 0)))
        tgtp = jnp.pad(target, (0, pad)).reshape(Bp, 1)
        bmp = jnp.pad(bm, (0, pad)).reshape(Bp, 1)
        wtp = jnp.pad(wt, (0, pad)).reshape(Bp, 1)
        x_spec = pl.BlockSpec((tile, C), lambda c, i: (c * steps_per_shard + i, 0))
        aux_spec = pl.BlockSpec((tile, 1), lambda c, i: (c * steps_per_shard + i, 0))
        class_axis = 1

    out_spec = pl.BlockSpec((1, 8, 128), lambda c, i: (c, 0, 0))
    kernel = functools.partial(_ldam_kernel, s=float(s), class_axis=class_axis)
    num_p, den_p = pl.pallas_call(
        kernel,
        grid=(_NUM_SHARDS, steps_per_shard),
        in_specs=[x_spec, aux_spec, aux_spec, aux_spec],
        out_specs=(out_spec, out_spec),
        out_shape=(jax.ShapeDtypeStruct((_NUM_SHARDS, 8, 128), jnp.float32),
                   jax.ShapeDtypeStruct((_NUM_SHARDS, 8, 128), jnp.float32)),
        compiler_params=pltpu.CompilerParams(
            dimension_semantics=("parallel", "arbitrary"),
            vmem_limit_bytes=int(vmem_limit)),
    )(xp, tgtp, bmp, wtp)

    # Global weighted mean (deferred divide: per-tile zero weight cannot NaN).
    return jnp.sum(num_p[:, 0, 0]) / jnp.sum(den_p[:, 0, 0])


def ldam_loss_ref(x, target, m_list, s=30.0, weight=None):
    """Pure-JAX reference matching the PyTorch forward."""
    x = x.astype(jnp.float32)
    B, C = x.shape
    onehot = jax.nn.one_hot(target, C, dtype=jnp.float32)
    batch_m = (onehot @ jnp.asarray(m_list, jnp.float32)).reshape(B, 1)
    out = jnp.where(onehot > 0, x - batch_m, x)
    logp = jax.nn.log_softmax(s * out, axis=1)
    nll = -jnp.take_along_axis(logp, target[:, None].astype(jnp.int32), axis=1)[:, 0]
    if weight is None:
        return jnp.mean(nll)
    w_t = jnp.asarray(weight, jnp.float32)[target]
    return jnp.sum(w_t * nll) / jnp.sum(w_t)


if __name__ == "__main__":
    # --- small-C path (classes on sublanes), mirroring LDAMLoss.__init__ ----
    cls_num_list = [100, 50, 30, 20, 10]          # C = 5 classes
    max_m, s = 0.5, 30.0
    m_np = 1.0 / np.sqrt(np.sqrt(np.asarray(cls_num_list, np.float64)))
    m_np = m_np * (max_m / np.max(m_np))
    m_list = jnp.asarray(m_np, jnp.float32)

    B, C = 8, len(cls_num_list)
    key = jax.random.PRNGKey(0)
    kx, kt, kx2, kt2 = jax.random.split(key, 4)
    x = jax.random.normal(kx, (B, C), jnp.float32)
    target = jax.random.randint(kt, (B,), 0, C, jnp.int32)

    loss = jax.block_until_ready(ldam_loss_pallas(x, target, m_list, s=s))
    ref = ldam_loss_ref(x, target, m_list, s=s)
    assert np.allclose(np.asarray(loss), np.asarray(ref), rtol=1e-4, atol=1e-4), (loss, ref)

    # DRW-weighted forward (self.weight set by drw()).
    beta = 0.9999
    eff = 1.0 - np.power(beta, cls_num_list)
    w_np = (1.0 - beta) / eff
    w_np = w_np / np.sum(w_np) * len(cls_num_list)
    w = jnp.asarray(w_np, jnp.float32)
    loss_w = jax.block_until_ready(ldam_loss_pallas(x, target, m_list, s=s, weight=w))
    ref_w = ldam_loss_ref(x, target, m_list, s=s, weight=w)
    assert np.allclose(np.asarray(loss_w), np.asarray(ref_w), rtol=1e-4, atol=1e-4), (loss_w, ref_w)

    # --- larger-C path (batch-major layout), exercises tiling + padding -----
    B2, C2 = 100, 160
    cls_num2 = np.linspace(200, 10, C2)
    m2 = 1.0 / np.sqrt(np.sqrt(cls_num2))
    m2 = jnp.asarray(m2 * (max_m / np.max(m2)), jnp.float32)
    x2 = jax.random.normal(kx2, (B2, C2), jnp.float32)
    t2 = jax.random.randint(kt2, (B2,), 0, C2, jnp.int32)
    loss2 = jax.block_until_ready(ldam_loss_pallas(x2, t2, m2, s=s))
    ref2 = ldam_loss_ref(x2, t2, m2, s=s)
    assert np.allclose(np.asarray(loss2), np.asarray(ref2), rtol=1e-4, atol=1e-4), (loss2, ref2)

    print("KERNEL_OK")
</pallas_src>

<mosaic_0001>
module attributes {stable_mosaic.version = 11 : i64} {
  func.func @_ldam_kernel(%arg0: i32, %arg1: i32, %arg2: memref<5x128xf32, #tpu.memory_space<vmem>>, %arg3: memref<1x128xi32, #tpu.memory_space<vmem>>, %arg4: memref<1x128xf32, #tpu.memory_space<vmem>>, %arg5: memref<1x128xf32, #tpu.memory_space<vmem>>, %arg6: memref<1x8x128xf32, #tpu.memory_space<vmem>>, %arg7: memref<1x8x128xf32, #tpu.memory_space<vmem>>) attributes {dimension_semantics = [#tpu.dimension_semantics<parallel>, #tpu.dimension_semantics<arbitrary>], iteration_bounds = array<i64: 2, 1>, scalar_prefetch = 0 : i64, scratch_operands = 0 : i64, tpu.core_type = #tpu.core_type<tc>, window_params = [{transform_indices = @transform_0, window_bounds = array<i64: 5, 128>}, {transform_indices = @transform_1, window_bounds = array<i64: 1, 128>}, {transform_indices = @transform_2, window_bounds = array<i64: 1, 128>}, {transform_indices = @transform_3, window_bounds = array<i64: 1, 128>}, {transform_indices = @transform_4, window_bounds = array<i64: 1, 8, 128>}, {transform_indices = @transform_5, window_bounds = array<i64: 1, 8, 128>}]} {
    %c0_i32 = arith.constant 0 : i32
    %0 = arith.cmpi eq, %arg1, %c0_i32 : i32
    %1 = arith.extui %0 : i1 to i32
    %c0_i32_0 = arith.constant 0 : i32
    %2 = arith.cmpi ne, %1, %c0_i32_0 : i32
    scf.if %2 {
      %cst_28 = arith.constant 0.000000e+00 : f32
      %54 = vector.broadcast %cst_28 : f32 to vector<1x8x128xf32>
      %c0_29 = arith.constant 0 : index
      %c0_30 = arith.constant 0 : index
      %c0_31 = arith.constant 0 : index
      %55 = vector.load %arg6[%c0_29, %c0_30, %c0_31] : memref<1x8x128xf32, #tpu.memory_space<vmem>>, vector<1x8x128xf32>
      tpu.vector_store %arg6[%c0_29, %c0_30, %c0_31], %54 {strides = array<i32>} : memref<1x8x128xf32, #tpu.memory_space<vmem>>, vector<1x8x128xf32>,
      %cst_32 = arith.constant 0.000000e+00 : f32
      %56 = vector.broadcast %cst_32 : f32 to vector<1x8x128xf32>
      %c0_33 = arith.constant 0 : index
      %c0_34 = arith.constant 0 : index
      %c0_35 = arith.constant 0 : index
      %57 = vector.load %arg7[%c0_33, %c0_34, %c0_35] : memref<1x8x128xf32, #tpu.memory_space<vmem>>, vector<1x8x128xf32>
      tpu.vector_store %arg7[%c0_33, %c0_34, %c0_35], %56 {strides = array<i32>} : memref<1x8x128xf32, #tpu.memory_space<vmem>>, vector<1x8x128xf32>,
    } else {
    }
    %c0 = arith.constant 0 : index
    %c0_1 = arith.constant 0 : index
    %3 = vector.load %arg2[%c0, %c0_1] : memref<5x128xf32, #tpu.memory_space<vmem>>, vector<5x128xf32>
    %c0_2 = arith.constant 0 : index
    %c0_3 = arith.constant 0 : index
    %4 = vector.load %arg3[%c0_2, %c0_3] : memref<1x128xi32, #tpu.memory_space<vmem>>, vector<1x128xi32>
    %c0_4 = arith.constant 0 : index
    %c0_5 = arith.constant 0 : index
    %5 = vector.load %arg4[%c0_4, %c0_5] : memref<1x128xf32, #tpu.memory_space<vmem>>, vector<1x128xf32>
    %c0_6 = arith.constant 0 : index
    %c0_7 = arith.constant 0 : index
    %6 = vector.load %arg5[%c0_6, %c0_7] : memref<1x128xf32, #tpu.memory_space<vmem>>, vector<1x128xf32>
    %7 = tpu.iota {dimensions = array<i32: 0>} : vector<5x128xi32>
    %8 = vector.broadcast %4 : vector<1x128xi32> to vector<5x128xi32>
    %9 = arith.cmpi eq, %7, %8 : vector<5x128xi32>
    %cst = arith.constant 3.000000e+01 : f32
    %10 = vector.broadcast %cst : f32 to vector<5x128xf32>
    %11 = arith.mulf %3, %10 : vector<5x128xf32>
    %cst_8 = arith.constant 3.000000e+01 : f32
    %12 = vector.broadcast %cst_8 : f32 to vector<1x128xf32>
    %13 = arith.mulf %5, %12 : vector<1x128xf32>
    %cst_9 = arith.constant 0.000000e+00 : f32
    %14 = vector.shape_cast %13 : vector<1x128xf32> to vector<1x128xf32>
    %15 = vector.broadcast %14 : vector<1x128xf32> to vector<5x128xf32>
    %16 = vector.broadcast %cst_9 : f32 to vector<5x128xf32>
    %17 = arith.select %9, %15, %16 : vector<5x128xi1>, vector<5x128xf32>
    %18 = arith.subf %11, %17 : vector<5x128xf32>
    %cst_10 = arith.constant dense<0xFF800000> : vector<128xf32>
    %19 = vector.multi_reduction <maximumf>, %18, %cst_10 [0] : vector<5x128xf32> to vector<128xf32>
    %20 = vector.shape_cast %19 : vector<128xf32> to vector<1x128xf32>
    %21 = vector.broadcast %20 : vector<1x128xf32> to vector<5x128xf32>
    %22 = arith.subf %18, %21 : vector<5x128xf32>
    %23 = math.exp %22 : vector<5x128xf32>
    %cst_11 = arith.constant dense<0.000000e+00> : vector<128xf32>
    %24 = vector.multi_reduction <add>, %23, %cst_11 [0] : vector<5x128xf32> to vector<128xf32>
    %25 = vector.shape_cast %24 : vector<128xf32> to vector<1x128xf32>
    %26 = math.log %25 : vector<1x128xf32>
    %27 = arith.addf %20, %26 : vector<1x128xf32>
    %cst_12 = arith.constant 0.000000e+00 : f32
    %28 = vector.broadcast %cst_12 : f32 to vector<5x128xf32>
    %29 = arith.select %9, %18, %28 : vector<5x128xi1>, vector<5x128xf32>
    %cst_13 = arith.constant dense<0.000000e+00> : vector<128xf32>
    %30 = vector.multi_reduction <add>, %29, %cst_13 [0] : vector<5x128xf32> to vector<128xf32>
    %31 = vector.shape_cast %30 : vector<128xf32> to vector<1x128xf32>
    %32 = arith.subf %27, %31 : vector<1x128xf32>
    %c0_14 = arith.constant 0 : index
    %c0_15 = arith.constant 0 : index
    %c0_16 = arith.constant 0 : index
    %33 = vector.load %arg6[%c0_14, %c0_15, %c0_16] : memref<1x8x128xf32, #tpu.memory_space<vmem>>, vector<1x8x128xf32>
    %34 = arith.mulf %6, %32 : vector<1x128xf32>
    %35 = vector.shape_cast %34 : vector<1x128xf32> to vector<1x1x128xf32>
    %cst_17 = arith.constant dense<0.000000e+00> : vector<1xf32>
    %36 = vector.multi_reduction <add>, %35, %cst_17 [1, 2] : vector<1x1x128xf32> to vector<1xf32>
    %37 = vector.shape_cast %36 : vector<1xf32> to vector<1x1x1xf32>
    %38 = vector.extract %37[0, 0, 0] : f32 from vector<1x1x1xf32>
    %39 = vector.broadcast %38 : f32 to vector<1x1xf32>
    %40 = vector.shape_cast %39 : vector<1x1xf32> to vector<1x1x1xf32>
    %41 = vector.broadcast %40 : vector<1x1x1xf32> to vector<1x8x128xf32>
    %42 = arith.addf %33, %41 : vector<1x8x128xf32>
    %c0_18 = arith.constant 0 : index
    %c0_19 = arith.constant 0 : index
    %c0_20 = arith.constant 0 : index
    %43 = vector.load %arg6[%c0_18, %c0_19, %c0_20] : memref<1x8x128xf32, #tpu.memory_space<vmem>>, vector<1x8x128xf32>
    tpu.vector_store %arg6[%c0_18, %c0_19, %c0_20], %42 {strides = array<i32>} : memref<1x8x128xf32, #tpu.memory_space<vmem>>, vector<1x8x128xf32>,
    %c0_21 = arith.constant 0 : index
    %c0_22 = arith.constant 0 : index
    %c0_23 = arith.constant 0 : index
    %44 = vector.load %arg7[%c0_21, %c0_22, %c0_23] : memref<1x8x128xf32, #tpu.memory_space<vmem>>, vector<1x8x128xf32>
    %45 = vector.shape_cast %6 : vector<1x128xf32> to vector<1x1x128xf32>
    %cst_24 = arith.constant dense<0.000000e+00> : vector<1xf32>
    %46 = vector.multi_reduction <add>, %45, %cst_24 [1, 2] : vector<1x1x128xf32> to vector<1xf32>
    %47 = vector.shape_cast %46 : vector<1xf32> to vector<1x1x1xf32>
    %48 = vector.extract %47[0, 0, 0] : f32 from vector<1x1x1xf32>
    %49 = vector.broadcast %48 : f32 to vector<1x1xf32>
    %50 = vector.shape_cast %49 : vector<1x1xf32> to vector<1x1x1xf32>
    %51 = vector.broadcast %50 : vector<1x1x1xf32> to vector<1x8x128xf32>
    %52 = arith.addf %44, %51 : vector<1x8x128xf32>
    %c0_25 = arith.constant 0 : index
    %c0_26 = arith.constant 0 : index
    %c0_27 = arith.constant 0 : index
    %53 = vector.load %arg7[%c0_25, %c0_26, %c0_27] : memref<1x8x128xf32, #tpu.memory_space<vmem>>, vector<1x8x128xf32>
    tpu.vector_store %arg7[%c0_25, %c0_26, %c0_27], %52 {strides = array<i32>} : memref<1x8x128xf32, #tpu.memory_space<vmem>>, vector<1x8x128xf32>,
    return
  }
  func.func @transform_0(%arg0: i32, %arg1: i32) -> (i32, i32) {
    %c1_i32 = arith.constant 1 : i32
    %0 = arith.muli %arg0, %c1_i32 : i32
    %1 = arith.addi %0, %arg1 : i32
    %c0_i32 = arith.constant 0 : i32
    %c0_i32_0 = arith.constant 0 : i32
    return %c0_i32, %1 : i32, i32
  }
  func.func @transform_1(%arg0: i32, %arg1: i32) -> (i32, i32) {
    %c1_i32 = arith.constant 1 : i32
    %0 = arith.muli %arg0, %c1_i32 : i32
    %1 = arith.addi %0, %arg1 : i32
    %c0_i32 = arith.constant 0 : i32
    %c0_i32_0 = arith.constant 0 : i32
    return %c0_i32, %1 : i32, i32
  }
  func.func @transform_2(%arg0: i32, %arg1: i32) -> (i32, i32) {
    %c1_i32 = arith.constant 1 : i32
    %0 = arith.muli %arg0, %c1_i32 : i32
    %1 = arith.addi %0, %arg1 : i32
    %c0_i32 = arith.constant 0 : i32
    %c0_i32_0 = arith.constant 0 : i32
    return %c0_i32, %1 : i32, i32
  }
  func.func @transform_3(%arg0: i32, %arg1: i32) -> (i32, i32) {
    %c1_i32 = arith.constant 1 : i32
    %0 = arith.muli %arg0, %c1_i32 : i32
    %1 = arith.addi %0, %arg1 : i32
    %c0_i32 = arith.constant 0 : i32
    %c0_i32_0 = arith.constant 0 : i32
    return %c0_i32, %1 : i32, i32
  }
  func.func @transform_4(%arg0: i32, %arg1: i32) -> (i32, i32, i32) {
    %c0_i32 = arith.constant 0 : i32
    %c0_i32_0 = arith.constant 0 : i32
    %c0_i32_1 = arith.constant 0 : i32
    return %arg0, %c0_i32, %c0_i32_0 : i32, i32, i32
  }
  func.func @transform_5(%arg0: i32, %arg1: i32) -> (i32, i32, i32) {
    %c0_i32 = arith.constant 0 : i32
    %c0_i32_0 = arith.constant 0 : i32
    %c0_i32_1 = arith.constant 0 : i32
    return %arg0, %c0_i32, %c0_i32_0 : i32, i32, i32
  }
}

</mosaic_0001>

<llo_original>
// kernel: tpu_custom_call.1
$region0: #{tpu_custom_call.1}
  #allocation0 [shape = 'u32[]', space=smem, size = 0x4, offset = 0x4, fixed_abs, tag = 'smem constant byte address 0x4 - core index']
  #allocation1 [shape = 'u32[72,128]{1,0:T(1,128)}', space=vmem, size = 0x9000, scoped, tag = 'internal scratch']
  %s0 = inlined_call_operand.hbm [shape: f32[5,256], index: 0, kind: input, shape index: {}]
  %s1 = inlined_call_operand.hbm [shape: s32[1,256], index: 1, kind: input, shape index: {}]
  %s2 = inlined_call_operand.hbm [shape: f32[1,256], index: 2, kind: input, shape index: {}]
  %s3 = inlined_call_operand.vmem [shape: f32[1,256], index: 3, kind: input, shape index: {}]
  %s4 = inlined_call_operand.hbm [shape: f32[2,8,128], index: 4, kind: output, shape index: {0}]
  %s5 = inlined_call_operand.hbm [shape: f32[2,8,128], index: 5, kind: output, shape index: {1}]
  %6 = xla_tuple %s4, %s5
  %s7 = sld [smem:[#allocation0]]
  $region73: #{tpu_custom_call.1} parent=0
    _
  %s9 = ssub.s32 1, %s7
  %s10 = scalar_select 0, %s9, %s7
  $region1: #{tpu_custom_call.1} parent=0
    #allocation2 [shape = 'u8[8192]{0}', space=vmem, size = 0x2000, scoped, tag = 'input window, operand 0']
    #allocation3 [shape = 's32[2]{0}', space=sflag, size = 0x8, scoped, tag = 'scoped memory for tpu_custom_call.1']
    #allocation4 [shape = 's32[2]{0}', space=sflag, size = 0x8, scoped, tag = 'scoped memory for tpu_custom_call.1']
    #allocation5 [shape = 'u8[1024]{0}', space=vmem, size = 0x400, scoped, tag = 'input window, operand 1']
    #allocation6 [shape = 's32[2]{0}', space=sflag, size = 0x8, scoped, tag = 'scoped memory for tpu_custom_call.1']
    #allocation7 [shape = 'u8[1024]{0}', space=vmem, size = 0x400, scoped, tag = 'input window, operand 2']
    #allocation8 [shape = 'u8[8192]{0}', space=vmem, size = 0x2000, scoped, tag = 'output window, operand 0']
    #allocation9 [shape = 'u8[8192]{0}', space=vmem, size = 0x2000, scoped, tag = 'output window, operand 1']
    #allocation10 [shape = 's32[2]{0}', space=sflag, size = 0x8, scoped, tag = 'scoped memory for tpu_custom_call.1']
    %11 = vsyncpa [#allocation3], 0
    %s12 = scalar_lea.sflag [#allocation3], 1
    %13 = vsyncpa %s12, 0
    %14 = vsyncpa [#allocation6], 0
    %s15 = scalar_lea.sflag [#allocation6], 1
    %16 = vsyncpa %s15, 0
    %17 = vsyncpa [#allocation4], 0
    %s18 = scalar_lea.sflag [#allocation4], 1
    %19 = vsyncpa %s18, 0
    %20 = vsyncpa [#allocation10], 0
    %s21 = scalar_lea.sflag [#allocation10], 1
    %22 = vsyncpa %s21, 0
    loop: start=0, step=1, limit=4
    $region2: #{tpu_custom_call.1} parent=1 // loop_pre_header
      _
    $region3: #{tpu_custom_call.1} parent=1 // loop_header
      %s24 = sphi 0, %s28
      %p25 = scmp.ge.s32.totalorder %s24, 4
      %s31 = sphi 0, %s43
      %s32 = sphi 0, %s39
      %s33 = sphi 0, %s31
      %s34 = sphi 0, %s32
      %s35 = sphi 0, %s33
      %s36 = sphi 0, %s34
      %s48 = sphi 0, %s50
      %s51 = sphi 0, %s48
      %s52 = sphi 0, %s51
      %s68 = sphi 0, %s52
      %s76 = sphi 0, %s78
      %s79 = sphi 0, %s76
      %s80 = sphi 0, %s79
      %s96 = sphi 0, %s80
      %s104 = sphi 0, %s106
      %s107 = sphi 0, %s104
      %s108 = sphi 0, %s107
      %s124 = sphi 0, %s108
      %s132 = sphi 0, %s134
      %s135 = sphi 0, %s132
      %s136 = sphi 0, %s135
      %s152 = sphi 0, %s136
      %s158 = sphi 0, %s160
      %s161 = sphi 0, %s158
      %s162 = sphi 0, %s161
      %s178 = sphi 0, %s162
      %s184 = sphi 0, %s186
      %s187 = sphi 0, %s184
      %s188 = sphi 0, %s187
      %s204 = sphi 0, %s188
    $region4: #{tpu_custom_call.1} parent=1 // loop_header_branch
      %27 = sbr.rel (%p25) target = $region8
    $region5: #{tpu_custom_call.1} parent=1 // loop_body
      %s29 = ssub.s32 %s24, 1
      %s30 = ssub.s32 %s24, 2
      %s37 = sadd.s32 1, %s32
      %p38 = scmp.ge.s32.totalorder %s37, 1
      %s39 = scalar_select %p38, 0, %s37
      %s40 = sadd.s32 1, %s31
      %s41 = scalar_select %p38, %s40, %s31
      %p42 = scmp.ge.s32.totalorder %s41, 2
      %s43 = scalar_select %p42, 0, %s41
      %s44 = sadd.s32 %s31, %s32
      %s45 = sadd.s32 %s43, %s39
      %s46 = ssub.s32 %s44, %s45
      %p47 = scmp.eq.s32.totalorder %s46, 0
      %s49 = sadd.s32 %s48, 1
      %s50 = scalar_select %p47, %s48, %s49
      %p53 = pneg %p47
      %p54 = scmp.eq.s32.totalorder %s24, 1
      %p55 = por %p53, %p54
      %p56 = scmp.ne.s32.totalorder %s48, %s51
      %p57 = scmp.eq.s32.totalorder %s24, 0
      %p58 = por %p56, %p57
      %p59 = scmp.ne.s32.totalorder %s48, %s51
      %p60 = scmp.eq.s32.totalorder %s29, 1
      %p61 = por %p59, %p60
      %p62 = scmp.ne.s32.totalorder %s51, %s52
      %p63 = scmp.eq.s32.totalorder %s29, 0
      %p64 = por %p62, %p63
      %p65 = scmp.ne.s32.totalorder %s51, %s52
      %p66 = scmp.eq.s32.totalorder %s30, 1
      %p67 = por %p65, %p66
      %p69 = scmp.ne.s32.totalorder %s52, %s68
      %p70 = scmp.eq.s32.totalorder %s30, 0
      %p71 = por %p69, %p70
      %s72 = sadd.s32 %s31, %s32
      %s73 = sadd.s32 %s43, %s39
      %s74 = ssub.s32 %s72, %s73
      %p75 = scmp.eq.s32.totalorder %s74, 0
      %s77 = sadd.s32 %s76, 1
      %s78 = scalar_select %p75, %s76, %s77
      %p81 = pneg %p75
      %p82 = scmp.eq.s32.totalorder %s24, 1
      %p83 = por %p81, %p82
      %p84 = scmp.ne.s32.totalorder %s76, %s79
      %p85 = scmp.eq.s32.totalorder %s24, 0
      %p86 = por %p84, %p85
      %p87 = scmp.ne.s32.totalorder %s76, %s79
      %p88 = scmp.eq.s32.totalorder %s29, 1
      %p89 = por %p87, %p88
      %p90 = scmp.ne.s32.totalorder %s79, %s80
      %p91 = scmp.eq.s32.totalorder %s29, 0
      %p92 = por %p90, %p91
      %p93 = scmp.ne.s32.totalorder %s79, %s80
      %p94 = scmp.eq.s32.totalorder %s30, 1
      %p95 = por %p93, %p94
      %p97 = scmp.ne.s32.totalorder %s80, %s96
      %p98 = scmp.eq.s32.totalorder %s30, 0
      %p99 = por %p97, %p98
      %s100 = sadd.s32 %s31, %s32
      %s101 = sadd.s32 %s43, %s39
      %s102 = ssub.s32 %s100, %s101
      %p103 = scmp.eq.s32.totalorder %s102, 0
      %s105 = sadd.s32 %s104, 1
      %s106 = scalar_select %p103, %s104, %s105
      %p109 = pneg %p103
      %p110 = scmp.eq.s32.totalorder %s24, 1
      %p111 = por %p109, %p110
      %p112 = scmp.ne.s32.totalorder %s104, %s107
      %p113 = scmp.eq.s32.totalorder %s24, 0
      %p114 = por %p112, %p113
      %p115 = scmp.ne.s32.totalorder %s104, %s107
      %p116 = scmp.eq.s32.totalorder %s29, 1
      %p117 = por %p115, %p116
      %p118 = scmp.ne.s32.totalorder %s107, %s108
      %p119 = scmp.eq.s32.totalorder %s29, 0
      %p120 = por %p118, %p119
      %p121 = scmp.ne.s32.totalorder %s107, %s108
      %p122 = scmp.eq.s32.totalorder %s30, 1
      %p123 = por %p121, %p122
      %p125 = scmp.ne.s32.totalorder %s108, %s124
      %p126 = scmp.eq.s32.totalorder %s30, 0
      %p127 = por %p125, %p126
      %s128 = sadd.s32 %s31, %s32
      %s129 = sadd.s32 %s43, %s39
      %s130 = ssub.s32 %s128, %s129
      %p131 = scmp.eq.s32.totalorder %s130, 0
      %s133 = sadd.s32 %s132, 1
      %s134 = scalar_select %p131, %s132, %s133
      %p137 = pneg %p131
      %p138 = scmp.eq.s32.totalorder %s24, 1
      %p139 = por %p137, %p138
      %p140 = scmp.ne.s32.totalorder %s132, %s135
      %p141 = scmp.eq.s32.totalorder %s24, 0
      %p142 = por %p140, %p141
      %p143 = scmp.ne.s32.totalorder %s132, %s135
      %p144 = scmp.eq.s32.totalorder %s29, 1
      %p145 = por %p143, %p144
      %p146 = scmp.ne.s32.totalorder %s135, %s136
      %p147 = scmp.eq.s32.totalorder %s29, 0
      %p148 = por %p146, %p147
      %p149 = scmp.ne.s32.totalorder %s135, %s136
      %p150 = scmp.eq.s32.totalorder %s30, 1
      %p151 = por %p149, %p150
      %p153 = scmp.ne.s32.totalorder %s136, %s152
      %p154 = scmp.eq.s32.totalorder %s30, 0
      %p155 = por %p153, %p154
      %s156 = ssub.s32 %s31, %s43
      %p157 = scmp.eq.s32.totalorder %s156, 0
      %s159 = sadd.s32 %s158, 1
      %s160 = scalar_select %p157, %s158, %s159
      %p163 = pneg %p157
      %p164 = scmp.eq.s32.totalorder %s24, 1
      %p165 = por %p163, %p164
      %p166 = scmp.ne.s32.totalorder %s158, %s161
      %p167 = scmp.eq.s32.totalorder %s24, 0
      %p168 = por %p166, %p167
      %p169 = scmp.ne.s32.totalorder %s158, %s161
      %p170 = scmp.eq.s32.totalorder %s29, 1
      %p171 = por %p169, %p170
      %p172 = scmp.ne.s32.totalorder %s161, %s162
      %p173 = scmp.eq.s32.totalorder %s29, 0
      %p174 = por %p172, %p173
      %p175 = scmp.ne.s32.totalorder %s161, %s162
      %p176 = scmp.eq.s32.totalorder %s30, 1
      %p177 = por %p175, %p176
      %p179 = scmp.ne.s32.totalorder %s162, %s178
      %p180 = scmp.eq.s32.totalorder %s30, 0
      %p181 = por %p179, %p180
      %s182 = ssub.s32 %s31, %s43
      %p183 = scmp.eq.s32.totalorder %s182, 0
      %s185 = sadd.s32 %s184, 1
      %s186 = scalar_select %p183, %s184, %s185
      %p189 = pneg %p183
      %p190 = scmp.eq.s32.totalorder %s24, 1
      %p191 = por %p189, %p190
      %p192 = scmp.ne.s32.totalorder %s184, %s187
      %p193 = scmp.eq.s32.totalorder %s24, 0
      %p194 = por %p192, %p193
      %p195 = scmp.ne.s32.totalorder %s184, %s187
      %p196 = scmp.eq.s32.totalorder %s29, 1
      %p197 = por %p195, %p196
      %p198 = scmp.ne.s32.totalorder %s187, %s188
      %p199 = scmp.eq.s32.totalorder %s29, 0
      %p200 = por %p198, %p199
      %p201 = scmp.ne.s32.totalorder %s187, %s188
      %p202 = scmp.eq.s32.totalorder %s30, 1
      %p203 = por %p201, %p202
      %p205 = scmp.ne.s32.totalorder %s188, %s204
      %p206 = scmp.eq.s32.totalorder %s30, 0
      %p207 = por %p205, %p206
      %p208 = scmp.le.s32.totalorder 1, %s24
      %p209 = scmp.lt.s32.totalorder %s24, 3
      %p210 = pnand %p208, %p209
      %p211 = pneg %p210
      // Predicated region
      $region9: #{tpu_custom_call.1} parent=5 // pred_check
        _
      $region10: #{tpu_custom_call.1} parent=5 // pred_check_branch
        %213 = sbr.rel (%p210) target = $region12
      $region11: #{tpu_custom_call.1} parent=5 // pred_region
        %s214 = ssub.s32 %s24, 1
      $region12: #{tpu_custom_call.1} parent=5 // pred_fallthru
        _
      %p215 = scmp.lt.s32.totalorder %s24, 2
      // Predicated region
      $region13: #{tpu_custom_call.1} parent=5 // pred_check
        %p216 = pneg %p215
      $region14: #{tpu_custom_call.1} parent=5 // pred_check_branch
        %218 = sbr.rel (%p216) target = $region16
      $region15: #{tpu_custom_call.1} parent=5 // pred_region
        // Predicated region
        $region17: #{tpu_custom_call.1} parent=15 // pred_check
          %p219 = pneg %p58
        $region18: #{tpu_custom_call.1} parent=15 // pred_check_branch
          %221 = sbr.rel (%p219) target = $region20
        $region19: #{tpu_custom_call.1} parent=15 // pred_region
          %s222 = sand.u32 %s48, 1
          %s223 = scalar_lea.sflag [#allocation3], %s222
          %s224 = sand.u32 %s48, 1
          %s225 = smul.addr %s224, 8
          %s226 = scalar_lea.vmem [#allocation2], %s225
          %s227 = sadd.s32 %s31, %s32
          %229 = vsyncadd %s223, 0
          %s230 = smul.addr %s227, 8
          %s231 = scalar_lea.hbm %s0, %s230
          %s233 = sshll.u32 %s231, 4
          %s234 = int_to_ptr.hbm [resolvable:$true] %s233
          %s235 = sshll.u32 %s226, 4
          %s236 = int_to_ptr.vmem [resolvable:$true] %s235
          %238 = dma.hbm_to_vmem [thread:$0]  %s234, 128, %s236, %s223
        $region20: #{tpu_custom_call.1} parent=15 // pred_fallthru
          _
        // Predicated region
        $region21: #{tpu_custom_call.1} parent=15 // pred_check
          %p239 = pneg %p86
        $region22: #{tpu_custom_call.1} parent=15 // pred_check_branch
          %241 = sbr.rel (%p239) target = $region24
        $region23: #{tpu_custom_call.1} parent=15 // pred_region
          %s242 = sand.u32 %s24, 1
          %s243 = scalar_lea.sflag [#allocation6], %s242
          %s244 = sand.u32 %s76, 1
          %s245 = scalar_lea.vmem [#allocation5], %s244
          %s246 = sadd.s32 %s31, %s32
          %248 = vsyncadd %s243, 0
          %s249 = scalar_lea.hbm %s1, %s246
          %s251 = sshll.u32 %s249, 4
          %s252 = int_to_ptr.hbm [resolvable:$true] %s251
          %s253 = sshll.u32 %s245, 4
          %s254 = int_to_ptr.vmem [resolvable:$true] %s253
          %256 = dma.hbm_to_vmem [thread:$0]  %s252, 16, %s254, %s243
        $region24: #{tpu_custom_call.1} parent=15 // pred_fallthru
          _
        // Predicated region
        $region25: #{tpu_custom_call.1} parent=15 // pred_check
          %p257 = pneg %p114
        $region26: #{tpu_custom_call.1} parent=15 // pred_check_branch
          %259 = sbr.rel (%p257) target = $region28
        $region27: #{tpu_custom_call.1} parent=15 // pred_region
          %s260 = sand.u32 %s24, 1
          %s261 = scalar_lea.sflag [#allocation6], %s260
          %s262 = sand.u32 %s104, 1
          %s263 = scalar_lea.vmem [#allocation7], %s262
          %s264 = sadd.s32 %s31, %s32
          %266 = vsyncadd %s261, 0
          %s267 = scalar_lea.hbm %s2, %s264
          %s269 = sshll.u32 %s267, 4
          %s270 = int_to_ptr.hbm [resolvable:$true] %s269
          %s271 = sshll.u32 %s263, 4
          %s272 = int_to_ptr.vmem [resolvable:$true] %s271
          %274 = dma.hbm_to_vmem [thread:$0]  %s270, 16, %s272, %s261
        $region28: #{tpu_custom_call.1} parent=15 // pred_fallthru
          _
        // Predicated region
        $region29: #{tpu_custom_call.1} parent=15 // pred_check
          %p275 = pneg %p142
        $region30: #{tpu_custom_call.1} parent=15 // pred_check_branch
          %277 = sbr.rel (%p275) target = $region32
        $region31: #{tpu_custom_call.1} parent=15 // pred_region
          %s278 = sadd.s32 %s31, %s32
          %p279 = scmp.lt.s32.totalorder %s278, 1
          %s280 = scalar_select %p279, %s278, 1
          %s281 = scalar_lea.vmem %s3, %s280
          %s282 = sadd.s32 %s31, %s32
        $region32: #{tpu_custom_call.1} parent=15 // pred_fallthru
          _
      $region16: #{tpu_custom_call.1} parent=5 // pred_fallthru
        _
      %p283 = scmp.le.s32.totalorder 1, %s24
      %p284 = scmp.lt.s32.totalorder %s24, 3
      %p285 = pnand %p283, %p284
      %p286 = pneg %p285
      // Predicated region
      $region33: #{tpu_custom_call.1} parent=5 // pred_check
        _
      $region34: #{tpu_custom_call.1} parent=5 // pred_check_branch
        %288 = sbr.rel (%p285) target = $region36
      $region35: #{tpu_custom_call.1} parent=5 // pred_region
        %s289 = ssub.s32 %s24, 1
        %s290 = sand.u32 %s51, 1
        %s291 = scalar_lea.sflag [#allocation3], %s290
        %s292 = sand.u32 %s51, 1
        %s293 = smul.addr %s292, 8
        %s294 = scalar_lea.vmem [#allocation2], %s293
        // Predicated region
        $region37: #{tpu_custom_call.1} parent=35 // pred_check
          %p295 = pneg %p64
        $region38: #{tpu_custom_call.1} parent=35 // pred_check_branch
          %297 = sbr.rel (%p295) target = $region40
        $region39: #{tpu_custom_call.1} parent=35 // pred_region
          %299 = dma.done %s291, 128
        $region40: #{tpu_custom_call.1} parent=35 // pred_fallthru
          _
        %s300 = sand.u32 %s29, 1
        %s301 = scalar_lea.sflag [#allocation6], %s300
        %s302 = sand.u32 %s79, 1
        %s303 = scalar_lea.vmem [#allocation5], %s302
        // Predicated region
        $region41: #{tpu_custom_call.1} parent=35 // pred_check
          %p304 = pneg %p92
        $region42: #{tpu_custom_call.1} parent=35 // pred_check_branch
          %306 = sbr.rel (%p304) target = $region44
        $region43: #{tpu_custom_call.1} parent=35 // pred_region
          %308 = dma.done %s301, 16
        $region44: #{tpu_custom_call.1} parent=35 // pred_fallthru
          _
        %s309 = sand.u32 %s29, 1
        %s310 = scalar_lea.sflag [#allocation6], %s309
        %s311 = sand.u32 %s107, 1
        %s312 = scalar_lea.vmem [#allocation7], %s311
        // Predicated region
        $region45: #{tpu_custom_call.1} parent=35 // pred_check
          %p313 = pneg %p120
        $region46: #{tpu_custom_call.1} parent=35 // pred_check_branch
          %315 = sbr.rel (%p313) target = $region48
        $region47: #{tpu_custom_call.1} parent=35 // pred_region
          %317 = dma.done %s310, 16
        $region48: #{tpu_custom_call.1} parent=35 // pred_fallthru
          _
        %s318 = sand.u32 %s51, 1
        %s319 = scalar_lea.sflag [#allocation3], %s318
        %s320 = sand.u32 %s51, 1
        %s321 = smul.addr %s320, 8
        %s322 = scalar_lea.vmem [#allocation2], %s321
        %p323 = pneg %p64
        %p324 = pneg %p61
        %s325 = sand.u32 %s29, 1
        %s326 = scalar_lea.sflag [#allocation6], %s325
        %s327 = sand.u32 %s79, 1
        %s328 = scalar_lea.vmem [#allocation5], %s327
        %p329 = pneg %p92
        %p330 = pneg %p89
        %s331 = sand.u32 %s29, 1
        %s332 = scalar_lea.sflag [#allocation6], %s331
        %s333 = sand.u32 %s107, 1
        %s334 = scalar_lea.vmem [#allocation7], %s333
        %p335 = pneg %p120
        %p336 = pneg %p117
        %s337 = sadd.s32 %s33, %s34
        %p338 = scmp.lt.s32.totalorder %s337, 1
        %s339 = scalar_select %p338, %s337, 1
        %s340 = scalar_lea.vmem %s3, %s339
        %p341 = pneg %p148
        %p342 = pneg %p145
        %p343 = pneg %p174
        %p344 = pneg %p171
        %s345 = sand.u32 %s161, 1
        %s346 = scalar_lea.sflag [#allocation4], %s345
        %s347 = sand.u32 %s161, 1
        %s348 = smul.addr %s347, 8
        %s349 = scalar_lea.vmem [#allocation8], %s348
        %p350 = pneg %p200
        %p351 = pneg %p197
        %s352 = sand.u32 %s187, 1
        %s353 = scalar_lea.sflag [#allocation10], %s352
        %s354 = sand.u32 %s187, 1
        %s355 = smul.addr %s354, 8
        %s356 = scalar_lea.vmem [#allocation9], %s355
        %s357 = sadd.s32 %s33, %s34
        %s358 = sadd.s32 %s33, %s34
        %s359 = sadd.s32 %s33, %s34
        %s360 = sadd.s32 %s33, %s34
        %p361 = scmp.lt.s32.totalorder %s360, 1
        %s362 = scalar_select %p361, %s360, 1
        %s363 = scalar_lea.vmem %s3, %s362
        %s364 = sadd.s32 %s33, %s34
        %p365 = scmp.eq.s32.totalorder %s34, 0
        // Predicated region
        $region49: #{tpu_custom_call.1} parent=35 // pred_check
          %p366 = pneg %p365
        $region50: #{tpu_custom_call.1} parent=35 // pred_check_branch
          %368 = sbr.rel (%p366) target = $region52
        $region51: #{tpu_custom_call.1} parent=35 // pred_region
          %369 = vst [vmem:[%s349] sm:$0xff] 0.0
          %370 = vst [vmem:[%s356] sm:$0xff] 0.0
        $region52: #{tpu_custom_call.1} parent=35 // pred_fallthru
          _
        %v371 = vld [vmem:[%s294] sm:$0x1f]
        %v372 = vld [vmem:[%s303] sm:$0x1]
        %v373 = vld [vmem:[%s312] sm:$0x1]
        %v374 = vld [vmem:[%s363] sm:$0x1]
        %v375 = vlaneseq
        %v376 = vshrl.u32 %v375, 7
        %v377 = vperm.slane %v372, 0
        %vm378 = vcmp.eq.s32.totalorder %v376, %v377
        %v379 = vmul.f32 %v371, 30.0
        %v380 = vmul.f32 %v373, 30.0
        %v382 = vperm.slane %v380, 0
        %v384 = vsel %vm378, %v382, 0.0
        %v385 = vsub.f32 %v379, %v384
        %vm386 = vcmask 1044480
        %v387 = vsel %vm386, %v385, -inf
        %v388 = vrot.slane %v387, 4
        %v389 = vmax.f32 %v387, %v388
        %v390 = vrot.slane %v389, 2
        %v391 = vmax.f32 %v389, %v390
        %v392 = vrot.slane %v391, 1
        %v393 = vmax.f32 %v391, %v392
        %v394 = vsub.f32 %v385, %v393
        %v395 = vmul.f32 %v394, 1.442695
        %v396 = vpow.pop %v395
        %v397 = vsel %vm386, %v396, 0.0
        %v398 = vrot.slane %v397, 4
        %v399 = vadd.f32 %v397, %v398
        %v400 = vrot.slane %v399, 2
        %v401 = vadd.f32 %v399, %v400
        %v402 = vrot.slane %v401, 1
        %v403 = vadd.f32 %v401, %v402
        %v404 = vlog2.pop %v403
        %v405 = vmul.f32 %v404, 0.6931472
        %v406 = vadd.f32 %v393, %v405
        %v407 = vsel %vm378, %v385, 0.0
        %v408 = vsel %vm386, %v407, 0.0
        %v409 = vrot.slane %v408, 4
        %v410 = vadd.f32 %v408, %v409
        %v411 = vrot.slane %v410, 2
        %v412 = vadd.f32 %v410, %v411
        %v413 = vrot.slane %v412, 1
        %v414 = vadd.f32 %v412, %v413
        %v415 = vsub.f32 %v406, %v414
        %v416 = vld [vmem:[%s349] sm:$0xff]
        %v417 = vmul.f32 %v374, %v415
        %vm418 = vcmask 1040384
        %v419 = vsel %vm418, %v417, 0.0
        %420 = vadd.xlane.f32.xlu0 %v419
        %v421 = vpop.xlane.xlu0 %420
        %v422 = vrot.slane %v421, 4
        %v423 = vadd.f32 %v421, %v422
        %v424 = vrot.slane %v423, 2
        %v425 = vadd.f32 %v423, %v424
        %v426 = vrot.slane %v425, 1
        %v427 = vadd.f32 %v425, %v426
        %s428 = vtos %v427
        %v429 = vstv %s428
        %v430 = vadd.f32 %v416, %v429
        %431 = vst [vmem:[%s349] sm:$0xff] %v430
        %v432 = vld [vmem:[%s356] sm:$0xff]
        %v433 = vsel %vm418, %v374, 0.0
        %434 = vadd.xlane.f32.xlu0 %v433
        %v435 = vpop.xlane.xlu0 %434
        %v436 = vrot.slane %v435, 4
        %v437 = vadd.f32 %v435, %v436
        %v438 = vrot.slane %v437, 2
        %v439 = vadd.f32 %v437, %v438
        %v440 = vrot.slane %v439, 1
        %v441 = vadd.f32 %v439, %v440
        %s442 = vtos %v441
        %v443 = vstv %s442
        %v444 = vadd.f32 %v432, %v443
        %445 = vst [vmem:[%s356] sm:$0xff] %v444
        %s446 = sand.u32 %s161, 1
        %s447 = scalar_lea.sflag [#allocation4], %s446
        %s448 = sand.u32 %s161, 1
        %s449 = smul.addr %s448, 8
        %s450 = scalar_lea.vmem [#allocation8], %s449
        %s451 = sand.u32 %s187, 1
        %s452 = scalar_lea.sflag [#allocation10], %s451
        %s453 = sand.u32 %s187, 1
        %s454 = smul.addr %s453, 8
        %s455 = scalar_lea.vmem [#allocation9], %s454
        // Predicated region
        $region53: #{tpu_custom_call.1} parent=35 // pred_check
          %p456 = pneg %p171
        $region54: #{tpu_custom_call.1} parent=35 // pred_check_branch
          %458 = sbr.rel (%p456) target = $region56
        $region55: #{tpu_custom_call.1} parent=35 // pred_region
          %460 = vsyncadd %s447, 0
          %s461 = smul.addr %s33, 8
          %s462 = scalar_lea.hbm %s4, %s461
          %s464 = sshll.u32 %s450, 4
          %s465 = int_to_ptr.vmem [resolvable:$true] %s464
          %s466 = sshll.u32 %s462, 4
          %s467 = int_to_ptr.hbm [resolvable:$true] %s466
          %469 = dma.vmem_to_hbm [thread:$0]  %s465, 128, %s467, %s447
        $region56: #{tpu_custom_call.1} parent=35 // pred_fallthru
          _
        // Predicated region
        $region57: #{tpu_custom_call.1} parent=35 // pred_check
          %p470 = pneg %p197
        $region58: #{tpu_custom_call.1} parent=35 // pred_check_branch
          %472 = sbr.rel (%p470) target = $region60
        $region59: #{tpu_custom_call.1} parent=35 // pred_region
          %474 = vsyncadd %s452, 0
          %s475 = smul.addr %s33, 8
          %s476 = scalar_lea.hbm %s5, %s475
          %s478 = sshll.u32 %s455, 4
          %s479 = int_to_ptr.vmem [resolvable:$true] %s478
          %s480 = sshll.u32 %s476, 4
          %s481 = int_to_ptr.hbm [resolvable:$true] %s480
          %483 = dma.vmem_to_hbm [thread:$0]  %s479, 128, %s481, %s452
        $region60: #{tpu_custom_call.1} parent=35 // pred_fallthru
          _
      $region36: #{tpu_custom_call.1} parent=5 // pred_fallthru
        _
      %p484 = scmp.le.s32.totalorder 2, %s24
      // Predicated region
      $region61: #{tpu_custom_call.1} parent=5 // pred_check
        %p485 = pneg %p484
      $region62: #{tpu_custom_call.1} parent=5 // pred_check_branch
        %487 = sbr.rel (%p485) target = $region64
      $region63: #{tpu_custom_call.1} parent=5 // pred_region
        %s488 = ssub.s32 %s24, 2
        // Predicated region
        $region65: #{tpu_custom_call.1} parent=63 // pred_check
          %p489 = pneg %p177
        $region66: #{tpu_custom_call.1} parent=63 // pred_check_branch
          %491 = sbr.rel (%p489) target = $region68
        $region67: #{tpu_custom_call.1} parent=63 // pred_region
          %s492 = sand.u32 %s162, 1
          %s493 = scalar_lea.sflag [#allocation4], %s492
          %s494 = sand.u32 %s162, 1
          %s495 = smul.addr %s494, 8
          %s496 = scalar_lea.vmem [#allocation8], %s495
          %498 = dma.done %s493, 128
        $region68: #{tpu_custom_call.1} parent=63 // pred_fallthru
          _
        // Predicated region
        $region69: #{tpu_custom_call.1} parent=63 // pred_check
          %p499 = pneg %p203
        $region70: #{tpu_custom_call.1} parent=63 // pred_check_branch
          %501 = sbr.rel (%p499) target = $region72
        $region71: #{tpu_custom_call.1} parent=63 // pred_region
          %s502 = sand.u32 %s188, 1
          %s503 = scalar_lea.sflag [#allocation10], %s502
          %s504 = sand.u32 %s188, 1
          %s505 = smul.addr %s504, 8
          %s506 = scalar_lea.vmem [#allocation9], %s505
          %508 = dma.done %s503, 128
        $region72: #{tpu_custom_call.1} parent=63 // pred_fallthru
          _
      $region64: #{tpu_custom_call.1} parent=5 // pred_fallthru
        _
    $region6: #{tpu_custom_call.1} parent=1 // loop_footer
      %s28 = sadd.s32 1, %s24
    $region7: #{tpu_custom_call.1} parent=1 // loop_footer_branch
      %23 = sbr.rel target = $region3
    $region8: #{tpu_custom_call.1} parent=1 // loop_exit
      _
    %509 = vsyncpa [#allocation3], 1
    %s510 = scalar_lea.sflag [#allocation3], 1
    %511 = vsyncpa %s510, 1
    %512 = vsyncpa [#allocation6], 1
    %s513 = scalar_lea.sflag [#allocation6], 1
    %514 = vsyncpa %s513, 1
    %515 = vsyncpa [#allocation4], 1
    %s516 = scalar_lea.sflag [#allocation4], 1
    %517 = vsyncpa %s516, 1
    %518 = vsyncpa [#allocation10], 1
    %s519 = scalar_lea.sflag [#allocation10], 1
    %520 = vsyncpa %s519, 1

</llo_original>
